<compile_context>
chip_gen: v7x
topology: tpu7x:2x2x1
jax: 0.10.0
libtpu: 0.0.40
codegen_flags: <defaults>
</compile_context>

<pallas_src>
import functools
import numpy as np

import jax
import jax.numpy as jnp
from jax.experimental import pallas as pl
from jax.experimental.pallas import tpu as pltpu


# -----------------------------------------------------------------------------
# Pallas fused matmul (+ bias + ReLU) kernel — the conv hot path
# -----------------------------------------------------------------------------

_TM_MAX = 512          # M tile (rows of the im2col matrix)
_TN_MAX = 512          # above this, N is tiled at 256
_TK_FULL_MAX = 4096    # above this, K is tiled at 512
_VMEM_LIMIT = 32 * 1024 * 1024   # safe on v5e/v6e/v7x; blocks here are small


def _round_up(x, m):
    return (x + m - 1) // m * m


@functools.lru_cache(maxsize=None)
def _get_matmul_call(Mp, Kp, Np, tm, tn, tk, act, has_bias):
    """Build (and cache) a pallas_call for (Mp,Kp)x(Kp,Np) with the given tiles."""
    gm, gn, gk = Mp // tm, Np // tn, Kp // tk
    needs_epilogue = has_bias or (act == "relu")

    def kernel(*refs):
        if has_bias:
            x_ref, w_ref, b_ref, o_ref = refs
        else:
            x_ref, w_ref, o_ref = refs
            b_ref = None

        @pl.when(pl.program_id(2) == 0)
        def _init():
            o_ref[...] = jnp.zeros_like(o_ref)

        # bf16 x bf16 -> f32 accumulation directly into the k-invariant
        # (VMEM-resident) output block; no scratch accumulator needed.
        o_ref[...] += jnp.dot(x_ref[...], w_ref[...],
                              preferred_element_type=jnp.float32)

        if needs_epilogue:
            @pl.when(pl.program_id(2) == pl.num_programs(2) - 1)
            def _finalize():
                y = o_ref[...]
                if has_bias:
                    y = y + b_ref[...]
                if act == "relu":
                    y = jnp.maximum(y, 0.0)
                o_ref[...] = y

    in_specs = [
        pl.BlockSpec((tm, tk), lambda i, j, k: (i, k)),
        pl.BlockSpec((tk, tn), lambda i, j, k: (k, j)),
    ]
    if has_bias:
        in_specs.append(pl.BlockSpec((1, tn), lambda i, j, k: (0, j)))

    cost = pl.CostEstimate(
        flops=2 * Mp * Np * Kp,
        transcendentals=0,
        bytes_accessed=Mp * Kp * 2 + Kp * Np * 2 + Mp * Np * 4,
    )

    return pl.pallas_call(
        kernel,
        out_shape=jax.ShapeDtypeStruct((Mp, Np), jnp.float32),
        grid_spec=pltpu.PrefetchScalarGridSpec(
            num_scalar_prefetch=0,
            grid=(gm, gn, gk),            # reduction axis last
            in_specs=in_specs,
            out_specs=pl.BlockSpec((tm, tn), lambda i, j, k: (i, j)),
        ),
        compiler_params=pltpu.CompilerParams(
            dimension_semantics=("parallel", "parallel", "arbitrary"),
            vmem_limit_bytes=_VMEM_LIMIT,
        ),
        cost_estimate=cost,
    )


def _plan_tiles(M, K, N):
    """Adaptive tile / padding plan.

    K and N use full-dim blocks whenever they fit (the (8,128) rule allows a
    block dim equal to the full array dim), so tiny channel counts (K=3, N=1,
    ...) are never padded to 128.  M is padded only to a multiple of 16 (bf16
    sublane packing) and tiled at <=512 rows.
    """
    if K <= _TK_FULL_MAX:
        Kp, tk = K, K
    else:
        Kp, tk = _round_up(K, 512), 512
    if N <= _TN_MAX:
        Np, tn = N, N
    else:
        Np, tn = _round_up(N, 256), 256
    Mp = _round_up(M, 16)
    if Mp > _TM_MAX:
        Mp, tm = _round_up(Mp, _TM_MAX), _TM_MAX
    else:
        tm = Mp
        # Split M across >=2 grid points so both v7x TensorCores get work even
        # for small layers (harmless sequential steps on single-core chips).
        if Np == tn and Mp >= 64 and Mp % 32 == 0:
            tm = Mp // 2
    return Mp, Kp, Np, tm, tn, tk


def matmul_bias_act(lhs, rhs, bias, act):
    """out = act(lhs @ rhs + bias); lhs/rhs bf16, f32 MXU accumulation."""
    M, K = lhs.shape
    K2, N = rhs.shape
    assert K == K2
    Mp, Kp, Np, tm, tn, tk = _plan_tiles(M, K, N)
    lp = lhs if (Mp == M and Kp == K) else jnp.pad(lhs, ((0, Mp - M), (0, Kp - K)))
    rp = rhs if (Kp == K and Np == N) else jnp.pad(rhs, ((0, Kp - K), (0, Np - N)))
    args = [lp, rp]
    has_bias = bias is not None
    if has_bias:
        b = bias.astype(jnp.float32).reshape(1, -1)
        if Np != N:
            b = jnp.pad(b, ((0, 0), (0, Np - N)))
        args.append(b)
    out = _get_matmul_call(Mp, Kp, Np, tm, tn, tk, act, has_bias)(*args)
    if Mp != M or Np != N:
        out = out[:M, :N]
    return out


# -----------------------------------------------------------------------------
# Conv2d (stride 1, arbitrary dilation/padding) as im2col + Pallas matmul
# -----------------------------------------------------------------------------

def apply_conv_layer(x, layer):
    """x: NHWC; layer: dict(w[bf16, scale-folded], bias|None, act, padding, dilation)."""
    w = layer["w"]
    p = layer["padding"]
    d = layer["dilation"]
    N, H, W, Cin = x.shape
    kh, kw, _, Cout = w.shape
    xb = x.astype(jnp.bfloat16)   # bf16 operands halve im2col + matmul HBM traffic
    xp = jnp.pad(xb, ((0, 0), (p, p), (p, p), (0, 0))) if p > 0 else xb
    Hout = H + 2 * p - d * (kh - 1)
    Wout = W + 2 * p - d * (kw - 1)
    if kh == 1 and kw == 1:
        patches = xp
    else:
        cols = []
        for i in range(kh):
            for j in range(kw):
                cols.append(xp[:, i * d:i * d + Hout, j * d:j * d + Wout, :])
        patches = jnp.concatenate(cols, axis=-1)   # (kh, kw, Cin) tap order
    lhs = patches.reshape(N * Hout * Wout, kh * kw * Cin)
    rhs = w.reshape(kh * kw * Cin, Cout)
    out = matmul_bias_act(lhs, rhs, layer["bias"], layer["act"])
    return out.reshape(N, Hout, Wout, Cout)


def apply_seq(x, layers):
    for l in layers:
        x = apply_conv_layer(x, l)
    return x


# -----------------------------------------------------------------------------
# JAX glue: pixel shuffle, bilinear (align_corners=True) resize, avg pool
# -----------------------------------------------------------------------------

def pixel_shuffle_nhwc(x, r):
    N, H, W, C = x.shape
    c = C // (r * r)
    x = x.reshape(N, H, W, c, r, r)
    x = jnp.transpose(x, (0, 1, 4, 2, 5, 3))
    return x.reshape(N, H * r, W * r, c)


def _interp_matrix(n_out, n_in):
    m = np.zeros((n_out, n_in), np.float32)
    if n_in == 1:
        m[:, 0] = 1.0
        return jnp.asarray(m)
    if n_out == 1:
        m[0, 0] = 1.0
        return jnp.asarray(m)
    pos = np.arange(n_out, dtype=np.float64) * (n_in - 1) / (n_out - 1)
    lo = np.clip(np.floor(pos).astype(np.int64), 0, n_in - 2)
    frac = (pos - lo).astype(np.float32)
    rows = np.arange(n_out)
    m[rows, lo] += 1.0 - frac
    m[rows, lo + 1] += frac
    return jnp.asarray(m)


def resize_bilinear_ac(x, out_h, out_w):
    """F.interpolate(mode='bilinear', align_corners=True) on NHWC."""
    Mh = _interp_matrix(out_h, x.shape[1])
    Mw = _interp_matrix(out_w, x.shape[2])
    y = jnp.einsum("oh,nhwc->nowc", Mh, x)
    y = jnp.einsum("pw,nowc->nopc", Mw, y)
    return y


def resize2x(x):
    return resize_bilinear_ac(x, x.shape[1] * 2, x.shape[2] * 2)


def avg_pool_nhwc(x, s):
    N, H, W, C = x.shape
    return x.reshape(N, H // s, s, W // s, s, C).mean(axis=(2, 4))


# -----------------------------------------------------------------------------
# Deterministic parameter construction (BN scale folded into bf16 weights)
# -----------------------------------------------------------------------------

class ParamGen:
    def __init__(self, seed=0):
        self.key = jax.random.PRNGKey(seed)

    def _next(self):
        self.key, sub = jax.random.split(self.key)
        return sub

    def conv(self, cin, cout, k):
        w = jax.random.normal(self._next(), (k, k, cin, cout), jnp.float32)
        return w * (1.0 / np.sqrt(cin * k * k))

    def vec(self, n):
        return jax.random.normal(self._next(), (n,), jnp.float32) * 0.01


def make_plain_conv(pg, cin, cout, k, padding=0, dilation=1):
    # Conv2d(bias=False), no norm, no activation (LightDASP.reduction1)
    return dict(w=pg.conv(cin, cout, k).astype(jnp.bfloat16),
                bias=None, act="none", padding=padding, dilation=dilation)


def make_bias_conv(pg, cin, cout, k, padding=0):
    # Conv2d(bias=True), no norm, no activation (final 1-channel heads)
    return dict(w=pg.conv(cin, cout, k).astype(jnp.bfloat16),
                bias=pg.vec(cout), act="none", padding=padding, dilation=1)


def make_bn_relu_conv(pg, cin, cout, k, padding, dilation, eps):
    # Conv2d(bias=False) + BatchNorm(default running stats, eval) + ReLU.
    # BN folds to scale = 1/sqrt(1+eps), bias = 0; the scale is folded into
    # the weights so the Pallas epilogue only applies the ReLU.
    scale = 1.0 / np.sqrt(1.0 + eps)
    w = (pg.conv(cin, cout, k) * scale).astype(jnp.bfloat16)
    return dict(w=w, bias=None, act="relu", padding=padding, dilation=dilation)


def make_cbr(pg, cin, cout, k, eps=1.1e-5):
    # conv1x1 / conv3x3 blocks (padding = k//2)
    return make_bn_relu_conv(pg, cin, cout, k, k // 2, 1, eps)


def make_lightdasp(pg, in_feat):
    f2, f4 = in_feat // 2, in_feat // 4
    eps = 1e-3  # myConv's BatchNorm eps
    p = {}
    p["red1"] = make_plain_conv(pg, in_feat, f2, 1)
    p["d3_1"] = make_bn_relu_conv(pg, f2, f4, 1, 0, 1, eps)
    p["d3_2"] = make_bn_relu_conv(pg, f4, f4, 3, 3, 3, eps)
    p["d6_1"] = make_bn_relu_conv(pg, f2 + f4, f4, 1, 0, 1, eps)
    p["d6_2"] = make_bn_relu_conv(pg, f4, f4, 3, 6, 6, eps)
    p["d12_1"] = make_bn_relu_conv(pg, in_feat, f4, 1, 0, 1, eps)
    p["d12_2"] = make_bn_relu_conv(pg, f4, f4, 3, 12, 12, eps)
    p["red2"] = make_bn_relu_conv(pg, f4 * 3 + f2, in_feat, 3, 1, 1, eps)
    return p


def apply_lightdasp(x, p):
    x = apply_conv_layer(x, p["red1"])
    d3 = apply_conv_layer(apply_conv_layer(x, p["d3_1"]), p["d3_2"])
    cat1 = jnp.concatenate([x, d3], axis=-1)
    d6 = apply_conv_layer(apply_conv_layer(cat1, p["d6_1"]), p["d6_2"])
    cat2 = jnp.concatenate([cat1, d6], axis=-1)
    d12 = apply_conv_layer(apply_conv_layer(cat2, p["d12_1"]), p["d12_2"])
    return apply_conv_layer(jnp.concatenate([x, d3, d6, d12], axis=-1), p["red2"])


def make_decoder(pg):
    d = {}
    d["ASPP5"] = make_lightdasp(pg, 128)
    d["cb5"] = [make_cbr(pg, 128, 64, 3), make_cbr(pg, 64, 32, 3),
                make_bias_conv(pg, 32, 1, 3, 1)]
    d["conv4_up"] = make_cbr(pg, 128, 320, 1)
    d["ASPP4"] = make_lightdasp(pg, 160)
    d["cb4"] = [make_cbr(pg, 164, 64, 3), make_cbr(pg, 64, 32, 3),
                make_bias_conv(pg, 32, 1, 3, 1)]
    d["conv3_up"] = make_cbr(pg, 288, 256, 3)
    d["ASPP3"] = make_lightdasp(pg, 64)
    d["cb3"] = [make_cbr(pg, 68, 32, 3), make_bias_conv(pg, 32, 1, 3, 1)]
    d["ASPP2"] = make_lightdasp(pg, 32)
    d["cb2"] = [make_cbr(pg, 36, 16, 3), make_bias_conv(pg, 16, 1, 3, 1)]
    d["ASPP1"] = make_lightdasp(pg, 8)
    d["cb1"] = [make_cbr(pg, 12, 8, 3), make_cbr(pg, 8, 4, 3),
                make_bias_conv(pg, 4, 1, 3, 1)]
    return d


def make_encoder(pg):
    # Deterministic surrogate for mit_b4 (see TODO at top).
    cfgs = [(4, 64), (8, 128), (16, 320), (32, 512)]
    return [(s, make_cbr(pg, 3, c, 1)) for s, c in cfgs]


def make_chfnet_params(seed=0):
    pg = ParamGen(seed)
    return {"enc": make_encoder(pg), "dec": make_decoder(pg)}


# -----------------------------------------------------------------------------
# Forward passes
# -----------------------------------------------------------------------------

def apply_encoder(x, enc):
    feats = []
    for stride, layer in enc:
        xd = avg_pool_nhwc(x, stride)
        feats.append(apply_conv_layer(xd, layer))
    return feats  # [64@H/4, 128@H/8, 320@H/16, 512@H/32]


def apply_decoder(dp, x_1, x_2, x_3, x_4, lap_list):
    rgb_lv4, rgb_lv3, rgb_lv2, rgb_lv1 = lap_list

    aspp5_in = pixel_shuffle_nhwc(x_4, 2)
    aspp5 = apply_lightdasp(aspp5_in, dp["ASPP5"])
    att5 = apply_seq(aspp5, dp["cb5"])
    att5_up = resize2x(att5)

    conv4 = apply_conv_layer(aspp5, dp["conv4_up"])
    aspp4_in = jnp.concatenate([x_3, conv4], axis=-1)
    sizeup_4 = pixel_shuffle_nhwc(aspp4_in, 2)
    aspp4 = apply_lightdasp(sizeup_4, dp["ASPP4"])
    aspp4_cat = jnp.concatenate([aspp4, rgb_lv4, att5_up], axis=-1)
    att4 = apply_seq(aspp4_cat, dp["cb4"])
    att4_up = resize2x(att4)

    conv3 = apply_conv_layer(jnp.concatenate([x_2, aspp4], axis=-1), dp["conv3_up"])
    sizeup_3 = pixel_shuffle_nhwc(conv3, 2)
    aspp3 = apply_lightdasp(sizeup_3, dp["ASPP3"])
    aspp3_cat = jnp.concatenate([aspp3, rgb_lv3, att4_up], axis=-1)
    att3 = apply_seq(aspp3_cat, dp["cb3"])
    att3_up = resize2x(att3)

    aspp2_in = jnp.concatenate([x_1, aspp3], axis=-1)
    sizeup_2 = pixel_shuffle_nhwc(aspp2_in, 2)
    aspp2 = apply_lightdasp(sizeup_2, dp["ASPP2"])
    aspp2_cat = jnp.concatenate([aspp2, rgb_lv2, att3_up], axis=-1)
    att2 = apply_seq(aspp2_cat, dp["cb2"])
    att2_up = resize2x(att2)

    sizeup_1 = pixel_shuffle_nhwc(aspp2, 2)
    aspp1 = apply_lightdasp(sizeup_1, dp["ASPP1"])
    att_out = apply_seq(jnp.concatenate([aspp1, rgb_lv1, att2_up], axis=-1), dp["cb1"])

    return att5_up, att4_up, att3_up, att2_up, att_out


def chfnet_forward(params, x_nhwc, max_depth=10.0):
    N, H, W, C = x_nhwc.shape
    c1, c2, c3, c4 = apply_encoder(x_nhwc, params["enc"])

    # Laplacian pyramid (bilinear, align_corners=True)
    rgb_down2 = resize_bilinear_ac(x_nhwc, H // 2, W // 2)
    rgb_down4 = resize_bilinear_ac(rgb_down2, H // 4, W // 4)
    rgb_down8 = resize_bilinear_ac(rgb_down4, H // 8, W // 8)
    rgb_down16 = resize_bilinear_ac(rgb_down8, H // 16, W // 16)
    rgb_down32 = resize_bilinear_ac(rgb_down16, H // 32, W // 32)
    rgb_up8 = resize_bilinear_ac(rgb_down16, H // 8, W // 8)
    rgb_up4 = resize_bilinear_ac(rgb_down8, H // 4, W // 4)
    rgb_up2 = resize_bilinear_ac(rgb_down4, H // 2, W // 2)
    rgb_up = resize_bilinear_ac(rgb_down2, H, W)
    del rgb_down32  # only used for lap5 in the reference, which is unused
    lap1 = x_nhwc - rgb_up
    lap2 = rgb_down2 - rgb_up2
    lap3 = rgb_down4 - rgb_up4
    lap4 = rgb_down8 - rgb_up8
    lap_list = [lap4, lap3, lap2, lap1]

    att5, att4, att3, att2, att_out = apply_decoder(
        params["dec"], c1, c2, c3, c4, lap_list
    )

    depth4 = att5
    depth3 = att4 + 0.1 * resize2x(depth4)
    depth2 = att3 + 0.2 * resize2x(depth3)
    depth1 = att2 + 0.3 * resize2x(depth2)
    att_img = att_out + 0.4 * depth1
    out_depth = jax.nn.sigmoid(att_img) * max_depth

    depth4 = jax.nn.sigmoid(
        resize_bilinear_ac(depth4, depth4.shape[1] * 8, depth4.shape[2] * 8)) * max_depth
    depth3 = jax.nn.sigmoid(
        resize_bilinear_ac(depth3, depth3.shape[1] * 4, depth3.shape[2] * 4)) * max_depth
    depth2 = jax.nn.sigmoid(resize2x(depth2)) * max_depth
    depth1 = jax.nn.sigmoid(resize2x(depth1)) * max_depth

    # return in PyTorch NCHW convention
    to_nchw = lambda t: jnp.transpose(t, (0, 3, 1, 2))
    return tuple(to_nchw(t) for t in (out_depth, depth4, depth3, depth2, depth1))


# -----------------------------------------------------------------------------
# Main
# -----------------------------------------------------------------------------

if __name__ == "__main__":
    key = jax.random.PRNGKey(0)
    k0, k1, k2, k3 = jax.random.split(key, 4)

    # --- quick sanity check of the Pallas fused matmul kernel -----------------
    a = jax.random.normal(k1, (64, 96), jnp.float32)
    b = jax.random.normal(k2, (96, 48), jnp.float32)
    bias = jax.random.normal(k3, (48,), jnp.float32)
    ref = jnp.maximum(a @ b + bias, 0.0)
    got = matmul_bias_act(a.astype(jnp.bfloat16), b.astype(jnp.bfloat16), bias, "relu")
    err = float(jnp.max(jnp.abs(ref - got)))
    scale = float(jnp.max(jnp.abs(ref))) + 1e-6
    assert err < 0.05 * scale, f"matmul kernel mismatch: {err} vs scale {scale}"

    # --- full CHFNet forward --------------------------------------------------
    # PyTorch-style NCHW input; H,W divisible by 32 (encoder stride requirement)
    x_nchw = jax.random.normal(k0, (1, 3, 64, 64), jnp.float32)
    x_nhwc = jnp.transpose(x_nchw, (0, 2, 3, 1))

    params = make_chfnet_params(seed=0)
    # jit the whole forward so the plain-JAX glue (pads / concats / einsum
    # resizes / transposes) is fused by XLA around the Pallas calls.
    fwd = jax.jit(functools.partial(chfnet_forward, params, max_depth=10.0))
    outs = fwd(x_nhwc)
    jax.block_until_ready(outs)
    print("KERNEL_OK")
</pallas_src>

<mosaic_0001>
module attributes {stable_mosaic.version = 11 : i64} {
  func.func @kernel(%arg0: i32, %arg1: i32, %arg2: i32, %arg3: memref<32x96xbf16, #tpu.memory_space<vmem>>, %arg4: memref<96x48xbf16, #tpu.memory_space<vmem>>, %arg5: memref<1x48xf32, #tpu.memory_space<vmem>>, %arg6: memref<32x48xf32, #tpu.memory_space<vmem>>) attributes {dimension_semantics = [#tpu.dimension_semantics<parallel>, #tpu.dimension_semantics<parallel>, #tpu.dimension_semantics<arbitrary>], iteration_bounds = array<i64: 2, 1, 1>, scalar_prefetch = 0 : i64, scratch_operands = 0 : i64, tpu.core_type = #tpu.core_type<tc>, window_params = [{transform_indices = @transform_0, window_bounds = array<i64: 32, 96>}, {transform_indices = @transform_1, window_bounds = array<i64: 96, 48>}, {transform_indices = @transform_2, window_bounds = array<i64: 1, 48>}, {transform_indices = @transform_3, window_bounds = array<i64: 32, 48>}]} {
    %c0_i32 = arith.constant 0 : i32
    %0 = arith.cmpi eq, %arg2, %c0_i32 : i32
    %1 = arith.extui %0 : i1 to i32
    %c0_i32_0 = arith.constant 0 : i32
    %2 = arith.cmpi ne, %1, %c0_i32_0 : i32
    scf.if %2 {
      %cst_10 = arith.constant 0.000000e+00 : f32
      %12 = vector.broadcast %cst_10 : f32 to vector<32x48xf32>
      %c0_11 = arith.constant 0 : index
      %c0_12 = arith.constant 0 : index
      %13 = vector.load %arg6[%c0_11, %c0_12] : memref<32x48xf32, #tpu.memory_space<vmem>>, vector<32x48xf32>
      tpu.vector_store %arg6[%c0_11, %c0_12], %12 {strides = array<i32>} : memref<32x48xf32, #tpu.memory_space<vmem>>, vector<32x48xf32>,
    } else {
    }
    %c0 = arith.constant 0 : index
    %c0_1 = arith.constant 0 : index
    %3 = vector.load %arg6[%c0, %c0_1] : memref<32x48xf32, #tpu.memory_space<vmem>>, vector<32x48xf32>
    %c0_2 = arith.constant 0 : index
    %c0_3 = arith.constant 0 : index
    %4 = vector.load %arg3[%c0_2, %c0_3] : memref<32x96xbf16, #tpu.memory_space<vmem>>, vector<32x96xbf16>
    %c0_4 = arith.constant 0 : index
    %c0_5 = arith.constant 0 : index
    %5 = vector.load %arg4[%c0_4, %c0_5] : memref<96x48xbf16, #tpu.memory_space<vmem>>, vector<96x48xbf16>
    %cst = arith.constant dense<0.000000e+00> : vector<32x48xf32>
    %6 = tpu.matmul %4, %5, %cst {dimension_numbers = #tpu.dot_dimension_numbers<[1], [0], [0], [1], [0, 0, 1, 1], [], []>} : vector<32x96xbf16>, vector<96x48xbf16>, vector<32x48xf32> -> vector<32x48xf32>
    %7 = arith.addf %3, %6 : vector<32x48xf32>
    %c0_6 = arith.constant 0 : index
    %c0_7 = arith.constant 0 : index
    %8 = vector.load %arg6[%c0_6, %c0_7] : memref<32x48xf32, #tpu.memory_space<vmem>>, vector<32x48xf32>
    tpu.vector_store %arg6[%c0_6, %c0_7], %7 {strides = array<i32>} : memref<32x48xf32, #tpu.memory_space<vmem>>, vector<32x48xf32>,
    %c0_i32_8 = arith.constant 0 : i32
    %9 = arith.cmpi eq, %arg2, %c0_i32_8 : i32
    %10 = arith.extui %9 : i1 to i32
    %c0_i32_9 = arith.constant 0 : i32
    %11 = arith.cmpi ne, %10, %c0_i32_9 : i32
    scf.if %11 {
      %c0_10 = arith.constant 0 : index
      %c0_11 = arith.constant 0 : index
      %12 = vector.load %arg6[%c0_10, %c0_11] : memref<32x48xf32, #tpu.memory_space<vmem>>, vector<32x48xf32>
      %c0_12 = arith.constant 0 : index
      %c0_13 = arith.constant 0 : index
      %13 = vector.load %arg5[%c0_12, %c0_13] : memref<1x48xf32, #tpu.memory_space<vmem>>, vector<1x48xf32>
      %14 = vector.broadcast %13 : vector<1x48xf32> to vector<32x48xf32>
      %15 = arith.addf %12, %14 : vector<32x48xf32>
      %cst_14 = arith.constant 0.000000e+00 : f32
      %16 = vector.broadcast %cst_14 : f32 to vector<32x48xf32>
      %17 = arith.maximumf %15, %16 : vector<32x48xf32>
      %c0_15 = arith.constant 0 : index
      %c0_16 = arith.constant 0 : index
      %18 = vector.load %arg6[%c0_15, %c0_16] : memref<32x48xf32, #tpu.memory_space<vmem>>, vector<32x48xf32>
      tpu.vector_store %arg6[%c0_15, %c0_16], %17 {strides = array<i32>} : memref<32x48xf32, #tpu.memory_space<vmem>>, vector<32x48xf32>,
    } else {
    }
    return
  }
  func.func @transform_0(%arg0: i32, %arg1: i32, %arg2: i32) -> (i32, i32) {
    %c0_i32 = arith.constant 0 : i32
    return %arg0, %arg2 : i32, i32
  }
  func.func @transform_1(%arg0: i32, %arg1: i32, %arg2: i32) -> (i32, i32) {
    %c0_i32 = arith.constant 0 : i32
    return %arg2, %arg1 : i32, i32
  }
  func.func @transform_2(%arg0: i32, %arg1: i32, %arg2: i32) -> (i32, i32) {
    %c0_i32 = arith.constant 0 : i32
    %c0_i32_0 = arith.constant 0 : i32
    return %c0_i32, %arg1 : i32, i32
  }
  func.func @transform_3(%arg0: i32, %arg1: i32, %arg2: i32) -> (i32, i32) {
    %c0_i32 = arith.constant 0 : i32
    return %arg0, %arg1 : i32, i32
  }
}

</mosaic_0001>

<llo_original>
// kernel: tpu_custom_call.1
$region0: #{tpu_custom_call.1}
  #allocation0 [shape = 'u32[]', space=smem, size = 0x4, offset = 0x4, fixed_abs, tag = 'smem constant byte address 0x4 - core index']
  #allocation1 [shape = 'u32[144,128]{1,0:T(1,128)}', space=vmem, size = 0x12000, scoped, tag = 'internal scratch']
  %s0 = inlined_call_operand.vmem [shape: bf16[64,96], index: 0, kind: input, shape index: {}]
  %s1 = inlined_call_operand.vmem [shape: bf16[96,48], index: 1, kind: input, shape index: {}]
  %s2 = inlined_call_operand.vmem [shape: f32[1,48], index: 2, kind: input, shape index: {}]
  %s3 = inlined_call_operand.vmem [shape: f32[64,48], index: 3, kind: output, shape index: {}]
  %s4 = sld [smem:[#allocation0]]
  $region53: #{tpu_custom_call.1} parent=0
    _
  %s6 = ssub.s32 1, %s4
  %s7 = scalar_select 0, %s6, %s4
  loop: start=0, step=1, limit=4
  $region2: #{tpu_custom_call.1} parent=0 // loop_pre_header
    _
  $region3: #{tpu_custom_call.1} parent=0 // loop_header
    %s9 = sphi 0, %s13
    %p10 = scmp.ge.s32.totalorder %s9, 4
    %s16 = sphi 0, %s35
    %s17 = sphi 0, %s31
    %s18 = sphi 0, %s27
    %s19 = sphi 0, %s16
    %s20 = sphi 0, %s17
    %s21 = sphi 0, %s18
    %s22 = sphi 0, %s19
    %s23 = sphi 0, %s20
    %s24 = sphi 0, %s21
    %s40 = sphi 0, %s42
    %s43 = sphi 0, %s40
    %s44 = sphi 0, %s43
    %s60 = sphi 0, %s44
    %s68 = sphi 0, %s70
    %s71 = sphi 0, %s68
    %s72 = sphi 0, %s71
    %s88 = sphi 0, %s72
    %s94 = sphi 0, %s96
    %s97 = sphi 0, %s94
    %s98 = sphi 0, %s97
    %s114 = sphi 0, %s98
    %s122 = sphi 0, %s124
    %s125 = sphi 0, %s122
    %s126 = sphi 0, %s125
    %s142 = sphi 0, %s126
  $region4: #{tpu_custom_call.1} parent=0 // loop_header_branch
    %12 = sbr.rel (%p10) target = $region8
  $region5: #{tpu_custom_call.1} parent=0 // loop_body
    %s14 = ssub.s32 %s9, 1
    %s15 = ssub.s32 %s9, 2
    %s25 = sadd.s32 1, %s18
    %p26 = scmp.ge.s32.totalorder %s25, 1
    %s27 = scalar_select %p26, 0, %s25
    %s28 = sadd.s32 1, %s17
    %s29 = scalar_select %p26, %s28, %s17
    %p30 = scmp.ge.s32.totalorder %s29, 1
    %s31 = scalar_select %p30, 0, %s29
    %s32 = sadd.s32 1, %s16
    %s33 = scalar_select %p30, %s32, %s16
    %p34 = scmp.ge.s32.totalorder %s33, 2
    %s35 = scalar_select %p34, 0, %s33
    %s36 = ssub.s32 %s16, %s35
    %s37 = ssub.s32 %s18, %s27
    %s38 = sor.u32 %s36, %s37
    %p39 = scmp.eq.s32.totalorder %s38, 0
    %s41 = sadd.s32 %s40, 1
    %s42 = scalar_select %p39, %s40, %s41
    %p45 = pneg %p39
    %p46 = scmp.eq.s32.totalorder %s9, 1
    %p47 = por %p45, %p46
    %p48 = scmp.ne.s32.totalorder %s40, %s43
    %p49 = scmp.eq.s32.totalorder %s9, 0
    %p50 = por %p48, %p49
    %p51 = scmp.ne.s32.totalorder %s40, %s43
    %p52 = scmp.eq.s32.totalorder %s14, 1
    %p53 = por %p51, %p52
    %p54 = scmp.ne.s32.totalorder %s43, %s44
    %p55 = scmp.eq.s32.totalorder %s14, 0
    %p56 = por %p54, %p55
    %p57 = scmp.ne.s32.totalorder %s43, %s44
    %p58 = scmp.eq.s32.totalorder %s15, 1
    %p59 = por %p57, %p58
    %p61 = scmp.ne.s32.totalorder %s44, %s60
    %p62 = scmp.eq.s32.totalorder %s15, 0
    %p63 = por %p61, %p62
    %s64 = ssub.s32 %s18, %s27
    %s65 = ssub.s32 %s17, %s31
    %s66 = sor.u32 %s64, %s65
    %p67 = scmp.eq.s32.totalorder %s66, 0
    %s69 = sadd.s32 %s68, 1
    %s70 = scalar_select %p67, %s68, %s69
    %p73 = pneg %p67
    %p74 = scmp.eq.s32.totalorder %s9, 1
    %p75 = por %p73, %p74
    %p76 = scmp.ne.s32.totalorder %s68, %s71
    %p77 = scmp.eq.s32.totalorder %s9, 0
    %p78 = por %p76, %p77
    %p79 = scmp.ne.s32.totalorder %s68, %s71
    %p80 = scmp.eq.s32.totalorder %s14, 1
    %p81 = por %p79, %p80
    %p82 = scmp.ne.s32.totalorder %s71, %s72
    %p83 = scmp.eq.s32.totalorder %s14, 0
    %p84 = por %p82, %p83
    %p85 = scmp.ne.s32.totalorder %s71, %s72
    %p86 = scmp.eq.s32.totalorder %s15, 1
    %p87 = por %p85, %p86
    %p89 = scmp.ne.s32.totalorder %s72, %s88
    %p90 = scmp.eq.s32.totalorder %s15, 0
    %p91 = por %p89, %p90
    %s92 = ssub.s32 %s17, %s31
    %p93 = scmp.eq.s32.totalorder %s92, 0
    %s95 = sadd.s32 %s94, 1
    %s96 = scalar_select %p93, %s94, %s95
    %p99 = pneg %p93
    %p100 = scmp.eq.s32.totalorder %s9, 1
    %p101 = por %p99, %p100
    %p102 = scmp.ne.s32.totalorder %s94, %s97
    %p103 = scmp.eq.s32.totalorder %s9, 0
    %p104 = por %p102, %p103
    %p105 = scmp.ne.s32.totalorder %s94, %s97
    %p106 = scmp.eq.s32.totalorder %s14, 1
    %p107 = por %p105, %p106
    %p108 = scmp.ne.s32.totalorder %s97, %s98
    %p109 = scmp.eq.s32.totalorder %s14, 0
    %p110 = por %p108, %p109
    %p111 = scmp.ne.s32.totalorder %s97, %s98
    %p112 = scmp.eq.s32.totalorder %s15, 1
    %p113 = por %p111, %p112
    %p115 = scmp.ne.s32.totalorder %s98, %s114
    %p116 = scmp.eq.s32.totalorder %s15, 0
    %p117 = por %p115, %p116
    %s118 = ssub.s32 %s16, %s35
    %s119 = ssub.s32 %s17, %s31
    %s120 = sor.u32 %s118, %s119
    %p121 = scmp.eq.s32.totalorder %s120, 0
    %s123 = sadd.s32 %s122, 1
    %s124 = scalar_select %p121, %s122, %s123
    %p127 = pneg %p121
    %p128 = scmp.eq.s32.totalorder %s9, 1
    %p129 = por %p127, %p128
    %p130 = scmp.ne.s32.totalorder %s122, %s125
    %p131 = scmp.eq.s32.totalorder %s9, 0
    %p132 = por %p130, %p131
    %p133 = scmp.ne.s32.totalorder %s122, %s125
    %p134 = scmp.eq.s32.totalorder %s14, 1
    %p135 = por %p133, %p134
    %p136 = scmp.ne.s32.totalorder %s125, %s126
    %p137 = scmp.eq.s32.totalorder %s14, 0
    %p138 = por %p136, %p137
    %p139 = scmp.ne.s32.totalorder %s125, %s126
    %p140 = scmp.eq.s32.totalorder %s15, 1
    %p141 = por %p139, %p140
    %p143 = scmp.ne.s32.totalorder %s126, %s142
    %p144 = scmp.eq.s32.totalorder %s15, 0
    %p145 = por %p143, %p144
    %p146 = scmp.le.s32.totalorder 1, %s9
    %p147 = scmp.lt.s32.totalorder %s9, 3
    %p148 = pnand %p146, %p147
    %p149 = pneg %p148
    // Predicated region
    $region9: #{tpu_custom_call.1} parent=5 // pred_check
      _
    $region10: #{tpu_custom_call.1} parent=5 // pred_check_branch
      %151 = sbr.rel (%p148) target = $region12
    $region11: #{tpu_custom_call.1} parent=5 // pred_region
      %s152 = ssub.s32 %s9, 1
      // Predicated region
      $region13: #{tpu_custom_call.1} parent=11 // pred_check
        %p153 = pneg %p84
      $region14: #{tpu_custom_call.1} parent=11 // pred_check_branch
        %155 = sbr.rel (%p153) target = $region16
      $region15: #{tpu_custom_call.1} parent=11 // pred_region
        %s156 = smul.u32 12, %s21
        %p157 = scmp.lt.s32.totalorder %s156, 11
        %s158 = scalar_select %p157, %s156, 11
        %p159 = scmp.lt.s32.totalorder %s20, 0
        %s160 = scalar_select %p159, %s20, 0
        %s161 = sadd.s32 %s160, %s158
        %s162 = smul.addr %s161, 4
        %s163 = scalar_lea.vmem %s1, %s162
        %s164 = smul.u32 12, %s21
      $region16: #{tpu_custom_call.1} parent=11 // pred_fallthru
        _
      // Predicated region
      $region17: #{tpu_custom_call.1} parent=11 // pred_check
        %p165 = pneg %p110
      $region18: #{tpu_custom_call.1} parent=11 // pred_check_branch
        %167 = sbr.rel (%p165) target = $region20
      $region19: #{tpu_custom_call.1} parent=11 // pred_region
        %p168 = scmp.lt.s32.totalorder %s20, 0
        %s169 = scalar_select %p168, %s20, 0
        %s170 = scalar_lea.vmem %s2, %s169
      $region20: #{tpu_custom_call.1} parent=11 // pred_fallthru
        _
    $region12: #{tpu_custom_call.1} parent=5 // pred_fallthru
      _
    %p171 = scmp.lt.s32.totalorder %s9, 2
    // Predicated region
    $region21: #{tpu_custom_call.1} parent=5 // pred_check
      %p172 = pneg %p171
    $region22: #{tpu_custom_call.1} parent=5 // pred_check_branch
      %174 = sbr.rel (%p172) target = $region24
    $region23: #{tpu_custom_call.1} parent=5 // pred_region
      // Predicated region
      $region25: #{tpu_custom_call.1} parent=23 // pred_check
        %p175 = pneg %p50
      $region26: #{tpu_custom_call.1} parent=23 // pred_check_branch
        %177 = sbr.rel (%p175) target = $region28
      $region27: #{tpu_custom_call.1} parent=23 // pred_region
        %s178 = smul.u32 4, %s16
        %p179 = scmp.lt.s32.totalorder %s178, 7
        %s180 = scalar_select %p179, %s178, 7
        %p181 = scmp.lt.s32.totalorder %s18, 0
        %s182 = scalar_select %p181, %s18, 0
        %s183 = sadd.s32 %s182, %s180
        %s184 = smul.addr %s183, 4
        %s185 = scalar_lea.vmem %s0, %s184
        %s186 = smul.u32 4, %s16
      $region28: #{tpu_custom_call.1} parent=23 // pred_fallthru
        _
    $region24: #{tpu_custom_call.1} parent=5 // pred_fallthru
      _
    %p187 = scmp.le.s32.totalorder 1, %s9
    %p188 = scmp.lt.s32.totalorder %s9, 3
    %p189 = pnand %p187, %p188
    %p190 = pneg %p189
    // Predicated region
    $region29: #{tpu_custom_call.1} parent=5 // pred_check
      _
    $region30: #{tpu_custom_call.1} parent=5 // pred_check_branch
      %192 = sbr.rel (%p189) target = $region32
    $region31: #{tpu_custom_call.1} parent=5 // pred_region
      %s193 = ssub.s32 %s9, 1
      %s194 = smul.u32 4, %s19
      %p195 = scmp.lt.s32.totalorder %s194, 7
      %s196 = scalar_select %p195, %s194, 7
      %p197 = scmp.lt.s32.totalorder %s21, 0
      %s198 = scalar_select %p197, %s21, 0
      %s199 = sadd.s32 %s198, %s196
      %s200 = smul.addr %s199, 4
      %s201 = scalar_lea.vmem %s0, %s200
      %p202 = pneg %p56
      %p203 = pneg %p53
      %s204 = smul.u32 12, %s21
      %p205 = scmp.lt.s32.totalorder %s204, 11
      %s206 = scalar_select %p205, %s204, 11
      %p207 = scmp.lt.s32.totalorder %s20, 0
      %s208 = scalar_select %p207, %s20, 0
      %s209 = sadd.s32 %s208, %s206
      %s210 = smul.addr %s209, 4
      %s211 = scalar_lea.vmem %s1, %s210
      %p212 = pneg %p84
      %p213 = pneg %p81
      %p214 = scmp.lt.s32.totalorder %s20, 0
      %s215 = scalar_select %p214, %s20, 0
      %s216 = scalar_lea.vmem %s2, %s215
      %p217 = pneg %p110
      %p218 = pneg %p107
      %p219 = pneg %p138
      %p220 = pneg %p135
      %s221 = smul.u32 4, %s19
      %p222 = scmp.lt.s32.totalorder %s221, 7
      %s223 = scalar_select %p222, %s221, 7
      %p224 = scmp.lt.s32.totalorder %s20, 0
      %s225 = scalar_select %p224, %s20, 0
      %s226 = sadd.s32 %s225, %s223
      %s227 = smul.addr %s226, 8
      %s228 = scalar_lea.vmem %s3, %s227
      %s229 = smul.u32 4, %s19
      %p230 = scmp.lt.s32.totalorder %s229, 7
      %s231 = scalar_select %p230, %s229, 7
      %p232 = scmp.lt.s32.totalorder %s21, 0
      %s233 = scalar_select %p232, %s21, 0
      %s234 = sadd.s32 %s233, %s231
      %s235 = smul.addr %s234, 4
      %s236 = scalar_lea.vmem %s0, %s235
      %s237 = smul.u32 4, %s19
      %s238 = smul.u32 12, %s21
      %p239 = scmp.lt.s32.totalorder %s238, 11
      %s240 = scalar_select %p239, %s238, 11
      %p241 = scmp.lt.s32.totalorder %s20, 0
      %s242 = scalar_select %p241, %s20, 0
      %s243 = sadd.s32 %s242, %s240
      %s244 = smul.addr %s243, 4
      %s245 = scalar_lea.vmem %s1, %s244
      %s246 = smul.u32 12, %s21
      %p247 = scmp.lt.s32.totalorder %s20, 0
      %s248 = scalar_select %p247, %s20, 0
      %s249 = scalar_lea.vmem %s2, %s248
      %s250 = smul.u32 4, %s19
      %p251 = scmp.lt.s32.totalorder %s250, 7
      %s252 = scalar_select %p251, %s250, 7
      %p253 = scmp.lt.s32.totalorder %s20, 0
      %s254 = scalar_select %p253, %s20, 0
      %s255 = sadd.s32 %s254, %s252
      %s256 = smul.addr %s255, 8
      %s257 = scalar_lea.vmem %s3, %s256
      %s258 = smul.u32 4, %s19
      %p260 = scmp.eq.s32.totalorder %s21, 0
      // Predicated region
      $region33: #{tpu_custom_call.1} parent=31 // pred_check
        %p261 = pneg %p260
      $region34: #{tpu_custom_call.1} parent=31 // pred_check_branch
        %263 = sbr.rel (%p261) target = $region36
      $region35: #{tpu_custom_call.1} parent=31 // pred_region
        %vm264 = vcmask 392192
        %265 = vst.msk [vmem:[%s257] sm:$0xff] %vm264, 0.0
        %266 = vst.msk [vmem:[%s257 + $0x8] sm:$0xff] %vm264, 0.0
        %267 = vst.msk [vmem:[%s257 + $0x10] sm:$0xff] %vm264, 0.0
        %268 = vst.msk [vmem:[%s257 + $0x18] sm:$0xff] %vm264, 0.0
      $region36: #{tpu_custom_call.1} parent=31 // pred_fallthru
        _
      %v269 = vld [vmem:[%s257] sm:$0xff]
      %v270 = vld [vmem:[%s257 + $0x8] sm:$0xff]
      %v271 = vld [vmem:[%s257 + $0x10] sm:$0xff]
      %v272 = vld [vmem:[%s257 + $0x18] sm:$0xff]
      %v273 = vld [vmem:[%s236] sm:$0xf]
      %v274 = vld [vmem:[%s236 + $0x4] sm:$0xf]
      %v275 = vld [vmem:[%s236 + $0x8] sm:$0xf]
      %v276 = vld [vmem:[%s236 + $0xc] sm:$0xf]
      %v277 = vld [vmem:[%s245] sm:$0xf]
      %v278 = vld [vmem:[%s245 + $0x4] sm:$0xf]
      %v279 = vld [vmem:[%s245 + $0x8] sm:$0xf]
      %v280 = vld [vmem:[%s245 + $0xc] sm:$0xf]
      %v281 = vld [vmem:[%s245 + $0x10] sm:$0xf]
      %v282 = vld [vmem:[%s245 + $0x14] sm:$0xf]
      %v283 = vld [vmem:[%s245 + $0x18] sm:$0xf]
      %v284 = vld [vmem:[%s245 + $0x1c] sm:$0xf]
      %v285 = vld [vmem:[%s245 + $0x20] sm:$0xf]
      %v286 = vld [vmem:[%s245 + $0x24] sm:$0xf]
      %v287 = vld [vmem:[%s245 + $0x28] sm:$0xf]
      %v288 = vld [vmem:[%s245 + $0x2c] sm:$0xf]
      %v293 = vunpack.c.l.b16 %v273
      %v294 = vunpack.c.l.b16 %v274
      %v295 = vunpack.c.l.b16 %v275
      %v296 = vunpack.c.l.b16 %v276
      %v297 = vpack.c.b16 %v294, %v293
      %v298 = vpack.c.b16 %v296, %v295
      %v311 = vunpack.c.l.b16 %v277
      %v312 = vunpack.c.l.b16 %v278
      %v313 = vunpack.c.l.b16 %v279
      %v314 = vunpack.c.l.b16 %v280
      %v315 = vunpack.c.l.b16 %v281
      %v316 = vunpack.c.l.b16 %v282
      %v317 = vunpack.c.l.b16 %v283
      %v318 = vunpack.c.l.b16 %v284
      %v319 = vunpack.c.l.b16 %v285
      %v320 = vunpack.c.l.b16 %v286
      %v321 = vunpack.c.l.b16 %v287
      %v322 = vunpack.c.l.b16 %v288
      %v323 = vpack.c.b16 %v312, %v311
      %v324 = vpack.c.b16 %v314, %v313
      %v325 = vpack.c.b16 %v316, %v315
      %v326 = vpack.c.b16 %v318, %v317
      %v327 = vpack.c.b16 %v320, %v319
      %v328 = vpack.c.b16 %v322, %v321
      %vm335 = vcmask 785408
      %v337 = vsel %vm335, %v297, 0
      %v340 = vsel %vm335, %v298, 0
      %342 = vmatprep.subr.bf16.mxu0 0
      %343 = vmatpush1.bf16.msra.mxu0 %v323
      %344 = vmatprep.subr.bf16.mxu0 0
      %345 = vmatpush1.bf16.msra.mxu0 %v324
      %346 = vmatprep.subr.bf16.mxu0 0
      %347 = vmatpush1.bf16.msra.mxu0 %v325
      %348 = vmatprep.subr.bf16.mxu0 0
      %349 = vmatpush1.bf16.msra.mxu0 %v326
      %350 = vmatprep.subr.bf16.mxu0 0
      %351 = vmatpush1.bf16.msra.mxu0 %v327
      %352 = vmatprep.subr.bf16.mxu0 0
      %353 = vmatpush1.bf16.msra.mxu0 %v328
      %354 = vmatprep.subr.bf16.mxu0 0
      %355 = vmatpush1.bf16.msra.mxu0 0
      %356 = vmatprep.subr.bf16.mxu0 0
      %357 = vmatpush1.bf16.msra.mxu0 0
      %358 = vmatprep.subr.bf16.mxu0 0
      %359 = vmatpush1.bf16.msra.mxu0 0
      %360 = vmatprep.subr.bf16.mxu0 0
      %361 = vmatpush1.bf16.msra.mxu0 0
      %362 = vmatprep.subr.bf16.mxu0 0
      %363 = vmatpush1.bf16.msra.mxu0 0
      %364 = vmatprep.subr.bf16.mxu0 0
      %365 = vmatpush1.bf16.msra.mxu0 0
      %366 = vmatprep.subr.bf16.mxu0 0
      %367 = vmatpush1.bf16.msra.mxu0 0
      %368 = vmatprep.subr.bf16.mxu0 0
      %369 = vmatpush1.bf16.msra.mxu0 0
      %370 = vmatprep.subr.bf16.mxu0 0
      %371 = vmatpush1.bf16.msra.mxu0 0
      %372 = vmatprep.subr.bf16.mxu0 0
      %373 = vmatpush1.bf16.msra.mxu0 0
      %374 = vmatprep.mubr.bf16.mxu0 0
      %375 = vmatmul.mubr.bf16.gmra.mrb[0].mxu0 %v337
      %v376 = vpop.f32.mrb[0].mxu0
      %v377 = vadd.f32 0.0, %v376
      %v378 = vpop.f32.mrb[0].mxu0
      %v379 = vpop.f32.mrb[0].mxu0
      %v380 = vadd.f32 0.0, %v379
      %v381 = vpop.f32.mrb[0].mxu0
      %382 = vmatprep.mubr.bf16.mxu0 0
      %383 = vmatmul.mubr.bf16.gmra.mrb[0].mxu0 %v340
      %v384 = vpop.f32.mrb[0].mxu0
      %v385 = vadd.f32 0.0, %v384
      %v386 = vpop.f32.mrb[0].mxu0
      %v387 = vpop.f32.mrb[0].mxu0
      %v388 = vadd.f32 0.0, %v387
      %v389 = vpop.f32.mrb[0].mxu0
      %390 = vdwg.mxu0
      %v391 = vadd.f32 %v269, %v377
      %v392 = vadd.f32 %v270, %v380
      %v393 = vadd.f32 %v271, %v385
      %v394 = vadd.f32 %v272, %v388
      %vm395 = vcmask 392192
      %396 = vst.msk [vmem:[%s257] sm:$0xff] %vm395, %v391
      %397 = vst.msk [vmem:[%s257 + $0x8] sm:$0xff] %vm395, %v392
      %398 = vst.msk [vmem:[%s257 + $0x10] sm:$0xff] %vm395, %v393
      %399 = vst.msk [vmem:[%s257 + $0x18] sm:$0xff] %vm395, %v394
      // Predicated region
      $region37: #{tpu_custom_call.1} parent=31 // pred_check
        %p400 = pneg %p260
      $region38: #{tpu_custom_call.1} parent=31 // pred_check_branch
        %402 = sbr.rel (%p400) target = $region40
      $region39: #{tpu_custom_call.1} parent=31 // pred_region
        %v403 = vld [vmem:[%s257] sm:$0xff]
        %v404 = vld [vmem:[%s257 + $0x8] sm:$0xff]
        %v405 = vld [vmem:[%s257 + $0x10] sm:$0xff]
        %v406 = vld [vmem:[%s257 + $0x18] sm:$0xff]
        %v407 = vld [vmem:[%s249] sm:$0x1]
        %v409 = vlaneseq
        %v410 = vshrl.u32 %v409, 7
        %v411 = vsub.s32 0, %v410
        %v412 = vrot.slane %v407, %v411
        %v414 = vadd.f32 %v403, %v412
        %v415 = vadd.f32 %v404, %v412
        %v416 = vadd.f32 %v405, %v412
        %v417 = vadd.f32 %v406, %v412
        %v418 = vmax.f32 %v414, 0.0
        %v419 = vmax.f32 %v415, 0.0
        %v420 = vmax.f32 %v416, 0.0
        %v421 = vmax.f32 %v417, 0.0
        %422 = vst.msk [vmem:[%s257] sm:$0xff] %vm395, %v418
        %423 = vst.msk [vmem:[%s257 + $0x8] sm:$0xff] %vm395, %v419
        %424 = vst.msk [vmem:[%s257 + $0x10] sm:$0xff] %vm395, %v420
        %425 = vst.msk [vmem:[%s257 + $0x18] sm:$0xff] %vm395, %v421
      $region40: #{tpu_custom_call.1} parent=31 // pred_fallthru
        _
      %s426 = smul.u32 4, %s19
      %p427 = scmp.lt.s32.totalorder %s426, 7
      %s428 = scalar_select %p427, %s426, 7
      %p429 = scmp.lt.s32.totalorder %s20, 0
      %s430 = scalar_select %p429, %s20, 0
      %s431 = sadd.s32 %s430, %s428
      %s432 = smul.addr %s431, 8
      %s433 = scalar_lea.vmem %s3, %s432
      // Predicated region
      $region41: #{tpu_custom_call.1} parent=31 // pred_check
        %p434 = pneg %p135
      $region42: #{tpu_custom_call.1} parent=31 // pred_check_branch
        %436 = sbr.rel (%p434) target = $region44
      $region43: #{tpu_custom_call.1} parent=31 // pred_region
        %s437 = smul.u32 4, %s19
      $region44: #{tpu_custom_call.1} parent=31 // pred_fallthru
        _
    $region32: #{tpu_custom_call.1} parent=5 // pred_fallthru
      _
    %p438 = scmp.le.s32.totalorder 2, %s9
    // Predicated region
    $region45: #{tpu_custom_call.1} parent=5 // pred_check
      %p439 = pneg %p438
    $region46: #{tpu_custom_call.1} parent=5 // pred_check_branch
      %441 = sbr.rel (%p439) target = $region48
    $region47: #{tpu_custom_call.1} parent=5 // pred_region
      %s442 = ssub.s32 %s9, 2
      // Predicated region
      $region49: #{tpu_custom_call.1} parent=47 // pred_check
        %p443 = pneg %p141
      $region50: #{tpu_custom_call.1} parent=47 // pred_check_branch
        %445 = sbr.rel (%p443) target = $region52
      $region51: #{tpu_custom_call.1} parent=47 // pred_region
        %s446 = smul.u32 4, %s22
        %p447 = scmp.lt.s32.totalorder %s446, 7
        %s448 = scalar_select %p447, %s446, 7
        %p449 = scmp.lt.s32.totalorder %s23, 0
        %s450 = scalar_select %p449, %s23, 0
        %s451 = sadd.s32 %s450, %s448
        %s452 = smul.addr %s451, 8
        %s453 = scalar_lea.vmem %s3, %s452
      $region52: #{tpu_custom_call.1} parent=47 // pred_fallthru
        _
    $region48: #{tpu_custom_call.1} parent=5 // pred_fallthru
      _
  $region6: #{tpu_custom_call.1} parent=0 // loop_footer
    %s13 = sadd.s32 1, %s9
  $region7: #{tpu_custom_call.1} parent=0 // loop_footer_branch
    %8 = sbr.rel target = $region3
  $region8: #{tpu_custom_call.1} parent=0 // loop_exit
    _

</llo_original>
